<compile_context>
chip_gen: v7x
topology: tpu7x:2x2x1
jax: 0.10.0
libtpu: 0.0.40
codegen_flags: <defaults>
</compile_context>

<pallas_src>
import math
from functools import partial

import jax
import jax.numpy as jnp
from jax import lax
from jax.experimental import pallas as pl
from jax.experimental.pallas import tpu as pltpu


_MAX_TILE_ROWS = 2048   # batch rows per grid step (in the original [B, D] layout)
_NORM_EPS_SQ = 1e-24    # (1e-12)^2, matches F.normalize(p=2, eps=1e-12)

_PARALLEL = pltpu.CompilerParams(dimension_semantics=("parallel",))


# ----------------------------- Pallas kernels -------------------------------

def _tanh_gates_normalize(emb, hidden, td, feat, w_emb, w_hh, w_feat, w_td, bias):
    """h' = tanh(emb@W_emb + hidden@W_hh + feat@W_feat + td*w_td + bias); row L2-norm."""
    gates = (
        jnp.dot(emb, w_emb, preferred_element_type=jnp.float32)
        + jnp.dot(hidden, w_hh, preferred_element_type=jnp.float32)
        + jnp.dot(feat, w_feat, preferred_element_type=jnp.float32)
        + td * w_td          # (T,1)*(1,D): VPU broadcast instead of a K=1 MXU pass
        + bias               # b_ih + b_hh folded at init
    )
    h_new = jnp.tanh(gates)
    ss = jnp.sum(h_new * h_new, axis=1, keepdims=True)
    inv = lax.rsqrt(jnp.maximum(ss, _NORM_EPS_SQ))   # EUP; == x / max(||x||, 1e-12)
    return h_new * inv


def _rnn_update_kernel(emb_ref, hid_ref, td_ref, feat_ref,
                       w_emb_ref, w_hh_ref, w_feat_ref, w_td_ref, b_ref,
                       out_ref):
    out_ref[...] = _tanh_gates_normalize(
        emb_ref[...].astype(jnp.float32), hid_ref[...].astype(jnp.float32),
        td_ref[...].astype(jnp.float32), feat_ref[...].astype(jnp.float32),
        w_emb_ref[...], w_hh_ref[...], w_feat_ref[...], w_td_ref[...], b_ref[...],
    ).astype(out_ref.dtype)


def _rnn_dual_update_kernel(user_ref, item_ref, td_ref, feat_ref,
                            iw_emb_ref, iw_hh_ref, iw_feat_ref, iw_td_ref, ib_ref,
                            uw_emb_ref, uw_hh_ref, uw_feat_ref, uw_td_ref, ub_ref,
                            item_out_ref, user_out_ref):
    """Fused item_update + user_update sharing the td / feature tiles in VMEM."""
    user = user_ref[...].astype(jnp.float32)
    item = item_ref[...].astype(jnp.float32)
    td = td_ref[...].astype(jnp.float32)
    feat = feat_ref[...].astype(jnp.float32)
    item_out_ref[...] = _tanh_gates_normalize(
        user, item, td, feat,
        iw_emb_ref[...], iw_hh_ref[...], iw_feat_ref[...], iw_td_ref[...], ib_ref[...],
    ).astype(item_out_ref.dtype)
    user_out_ref[...] = _tanh_gates_normalize(
        item, user, td, feat,
        uw_emb_ref[...], uw_hh_ref[...], uw_feat_ref[...], uw_td_ref[...], ub_ref[...],
    ).astype(user_out_ref.dtype)


def _make_project_kernel(pack):
    """out = emb * (1 + Linear(td)), lane-packed: emb is (T, pack*D), td is (T, pack)."""
    def kernel(emb_ref, td_ref, expand_ref, b_ref, out_ref):
        emb = emb_ref[...].astype(jnp.float32)
        td = td_ref[...].astype(jnp.float32)
        if pack == 1:
            proj = td * expand_ref[...] + b_ref[...]             # pure VPU broadcast
        else:
            # (T, pack) @ (pack, pack*D): drops td[row]*w into the correct D lanes,
            # keeping the elementwise multiply and the store 128-lane dense.
            proj = jnp.dot(td, expand_ref[...],
                           preferred_element_type=jnp.float32) + b_ref[...]
        out_ref[...] = (emb * (1.0 + proj)).astype(out_ref.dtype)
    return kernel


# ------------------------- tiling / BlockSpec helpers ------------------------

def _round_up(x, m):
    return ((x + m - 1) // m) * m


def _pad_rows(x, rows):
    pad = rows - x.shape[0]
    return x if pad == 0 else jnp.pad(x, ((0, pad), (0, 0)))


def _choose_tiling(batch, row_align):
    tile = min(_round_up(_MAX_TILE_ROWS, row_align), _round_up(batch, row_align))
    return tile, _round_up(batch, tile)


def _row_spec(tile, cols):
    return pl.BlockSpec((tile, cols), lambda i: (i, 0))


def _weight_spec(shape):
    return pl.BlockSpec(shape, lambda i: (0, 0))


# ----------------------------- Pallas wrappers ------------------------------

def _rnn_update(emb_in, hidden, td, feat, wp):
    B, D = hidden.shape
    F = feat.shape[1]
    tile, pad_b = _choose_tiling(B, 8)
    grid = pad_b // tile
    out = pl.pallas_call(
        _rnn_update_kernel,
        out_shape=jax.ShapeDtypeStruct((pad_b, D), jnp.float32),
        grid=(grid,),
        in_specs=[_row_spec(tile, D), _row_spec(tile, D),
                  _row_spec(tile, 1), _row_spec(tile, F),
                  _weight_spec((D, D)), _weight_spec((D, D)),
                  _weight_spec((F, D)), _weight_spec((1, D)), _weight_spec((1, D))],
        out_specs=_row_spec(tile, D),
        compiler_params=_PARALLEL,
    )(_pad_rows(emb_in, pad_b), _pad_rows(hidden, pad_b),
      _pad_rows(td, pad_b), _pad_rows(feat, pad_b),
      wp["w_emb"], wp["w_hh"], wp["w_feat"], wp["w_td"], wp["bias"])
    return out[:B]


def _rnn_dual_update(user_emb, item_emb, td, feat, item_wp, user_wp):
    B, D = user_emb.shape
    F = feat.shape[1]
    tile, pad_b = _choose_tiling(B, 8)
    grid = pad_b // tile
    w_specs = [_weight_spec((D, D)), _weight_spec((D, D)),
               _weight_spec((F, D)), _weight_spec((1, D)), _weight_spec((1, D))]
    item_out, user_out = pl.pallas_call(
        _rnn_dual_update_kernel,
        out_shape=(jax.ShapeDtypeStruct((pad_b, D), jnp.float32),
                   jax.ShapeDtypeStruct((pad_b, D), jnp.float32)),
        grid=(grid,),
        in_specs=[_row_spec(tile, D), _row_spec(tile, D),
                  _row_spec(tile, 1), _row_spec(tile, F)] + w_specs + w_specs,
        out_specs=(_row_spec(tile, D), _row_spec(tile, D)),
        compiler_params=_PARALLEL,
    )(_pad_rows(user_emb, pad_b), _pad_rows(item_emb, pad_b),
      _pad_rows(td, pad_b), _pad_rows(feat, pad_b),
      item_wp["w_emb"], item_wp["w_hh"], item_wp["w_feat"], item_wp["w_td"], item_wp["bias"],
      user_wp["w_emb"], user_wp["w_hh"], user_wp["w_feat"], user_wp["w_td"], user_wp["bias"])
    return item_out[:B], user_out[:B]


def _context_convert(emb, td, pp):
    B, D = emb.shape
    expand = pp["expand"]            # (pack, pack*D)
    b_row = pp["bias"]               # (1, pack*D)
    pack = expand.shape[0]
    W = pack * D
    tile, pad_b = _choose_tiling(B, 8 * pack)
    rows, tile_rows = pad_b // pack, tile // pack
    grid = rows // tile_rows
    # Row-major reshapes: free layout plumbing (contiguous), makes stores lane-dense.
    emb_p = _pad_rows(emb, pad_b).reshape(rows, W)
    td_p = _pad_rows(td, pad_b).reshape(rows, pack)
    out = pl.pallas_call(
        _make_project_kernel(pack),
        out_shape=jax.ShapeDtypeStruct((rows, W), jnp.float32),
        grid=(grid,),
        in_specs=[_row_spec(tile_rows, W), _row_spec(tile_rows, pack),
                  _weight_spec((pack, W)), _weight_spec((1, W))],
        out_specs=_row_spec(tile_rows, W),
        compiler_params=_PARALLEL,
    )(emb_p, td_p, expand, b_row)
    return out.reshape(pad_b, D)[:B]


# ----------------------------- Parameter setup ------------------------------

def init_jodie_params(key, embedding_dim, num_features):
    """Deterministic init matching the PyTorch module's shapes / default init."""
    rnn_input_size = embedding_dim + 1 + num_features
    ks = jax.random.split(key, 10)

    def uniform(k, shape, stdv):
        return jax.random.uniform(k, shape, jnp.float32, -stdv, stdv)

    stdv_rnn = 1.0 / math.sqrt(embedding_dim)   # nn.RNNCell default init
    return {
        "item_rnn": {
            "w_ih": uniform(ks[0], (embedding_dim, rnn_input_size), stdv_rnn),
            "b_ih": uniform(ks[1], (embedding_dim,), stdv_rnn),
            "w_hh": uniform(ks[2], (embedding_dim, embedding_dim), stdv_rnn),
            "b_hh": uniform(ks[3], (embedding_dim,), stdv_rnn),
        },
        "user_rnn": {
            "w_ih": uniform(ks[4], (embedding_dim, rnn_input_size), stdv_rnn),
            "b_ih": uniform(ks[5], (embedding_dim,), stdv_rnn),
            "w_hh": uniform(ks[6], (embedding_dim, embedding_dim), stdv_rnn),
            "b_hh": uniform(ks[7], (embedding_dim,), stdv_rnn),
        },
        # embedding_layer: NormalLinear(1, embedding_dim), normal(0, 1/sqrt(1))
        "embedding_layer": {
            "w": jax.random.normal(ks[8], (embedding_dim, 1), jnp.float32),
            "b": jax.random.normal(ks[9], (embedding_dim,), jnp.float32),
        },
    }


def prepare_kernel_params(params, embedding_dim, num_features):
    """One-time layout prep: split/transpose W_ih, fold biases, build the
    lane-dense expand matrix for the project branch."""
    D, F = embedding_dim, num_features

    def prep_rnn(p):
        w_ih_t = p["w_ih"].T                              # (D + 1 + F, D)
        return {
            "w_emb": jnp.asarray(w_ih_t[:D, :]),          # (D, D)
            "w_td": jnp.asarray(w_ih_t[D:D + 1, :]),      # (1, D)
            "w_feat": jnp.asarray(w_ih_t[D + 1:, :]),     # (F, D)
            "w_hh": jnp.asarray(p["w_hh"].T),             # (D, D)
            "bias": (p["b_ih"] + p["b_hh"]).reshape(1, D),
        }

    w = params["embedding_layer"]["w"].reshape(1, D)
    b = params["embedding_layer"]["b"].reshape(1, D)
    pack = 128 // D if 128 % D == 0 else 1
    if pack > 1:
        expand = jnp.zeros((pack, pack * D), jnp.float32)
        for g in range(pack):
            expand = expand.at[g, g * D:(g + 1) * D].set(w[0])
        proj_bias = jnp.tile(b, (1, pack))
    else:
        expand, proj_bias = w, b
    return {
        "item_rnn": prep_rnn(params["item_rnn"]),
        "user_rnn": prep_rnn(params["user_rnn"]),
        "project": {"expand": expand, "bias": proj_bias},
    }


# ------------------------------- JODIE forward ------------------------------

@partial(jax.jit, static_argnames=("select",))
def jodie_forward(kparams, user_embeddings, item_embeddings,
                  timediffs=None, features=None, select=None):
    """Mirrors JODIE.forward(): RNNCell + F.normalize, or context_convert."""
    if select == "item_update":
        return _rnn_update(user_embeddings, item_embeddings, timediffs, features,
                           kparams["item_rnn"])
    elif select == "user_update":
        return _rnn_update(item_embeddings, user_embeddings, timediffs, features,
                           kparams["user_rnn"])
    elif select == "project":
        return _context_convert(user_embeddings, timediffs, kparams["project"])
    raise ValueError(f"unknown select: {select}")
    # TODO(synk): neighbor_aggregate / predict_label / predict_item_embedding /
    # trans_p are auxiliary methods not on the forward() path; not implemented.


@jax.jit
def jodie_dual_update(kparams, user_embeddings, item_embeddings, timediffs, features):
    """Fused item_update + user_update in one pallas_call (shared td/feat DMA)."""
    return _rnn_dual_update(user_embeddings, item_embeddings, timediffs, features,
                            kparams["item_rnn"], kparams["user_rnn"])


# ------------------------------ pure-JAX reference ---------------------------

def _reference_forward(params, user_emb, item_emb, td, feat, select):
    hp = lax.Precision.HIGHEST

    def rnn(x, h, p):
        pre = (jnp.dot(x, p["w_ih"].T, precision=hp) + p["b_ih"]
               + jnp.dot(h, p["w_hh"].T, precision=hp) + p["b_hh"])
        h_new = jnp.tanh(pre)
        n = jnp.sqrt(jnp.sum(h_new * h_new, axis=1, keepdims=True))
        return h_new / jnp.maximum(n, 1e-12)

    if select == "item_update":
        return rnn(jnp.concatenate([user_emb, td, feat], axis=1), item_emb,
                   params["item_rnn"])
    if select == "user_update":
        return rnn(jnp.concatenate([item_emb, td, feat], axis=1), user_emb,
                   params["user_rnn"])
    if select == "project":
        p = params["embedding_layer"]
        return user_emb * (1.0 + jnp.dot(td, p["w"].T, precision=hp) + p["b"])
    raise ValueError(select)


# ---------------------------------- main -------------------------------------

if __name__ == "__main__":
    EMBED_DIM = 32
    NUM_FEATURES = 4
    BATCH = 8

    key = jax.random.PRNGKey(0)
    k_params, k_u, k_i, k_t, k_f = jax.random.split(key, 5)

    params = init_jodie_params(k_params, EMBED_DIM, NUM_FEATURES)
    kparams = prepare_kernel_params(params, EMBED_DIM, NUM_FEATURES)

    user_emb = jax.random.normal(k_u, (BATCH, EMBED_DIM), jnp.float32)
    item_emb = jax.random.normal(k_i, (BATCH, EMBED_DIM), jnp.float32)
    timediffs = jax.random.normal(k_t, (BATCH, 1), jnp.float32)
    features = jax.random.normal(k_f, (BATCH, NUM_FEATURES), jnp.float32)

    out_item = jodie_forward(kparams, user_emb, item_emb, timediffs, features,
                             select="item_update")
    out_user = jodie_forward(kparams, user_emb, item_emb, timediffs, features,
                             select="user_update")
    out_proj = jodie_forward(kparams, user_emb, item_emb, timediffs, features,
                             select="project")
    fused_item, fused_user = jodie_dual_update(kparams, user_emb, item_emb,
                                               timediffs, features)
    jax.block_until_ready((out_item, out_user, out_proj, fused_item, fused_user))

    ref_item = _reference_forward(params, user_emb, item_emb, timediffs, features,
                                  "item_update")
    ref_user = _reference_forward(params, user_emb, item_emb, timediffs, features,
                                  "user_update")
    ref_proj = _reference_forward(params, user_emb, item_emb, timediffs, features,
                                  "project")

    assert out_item.shape == (BATCH, EMBED_DIM)
    assert out_user.shape == (BATCH, EMBED_DIM)
    assert out_proj.shape == (BATCH, EMBED_DIM)
    tol = dict(atol=1e-3, rtol=1e-3)
    assert bool(jnp.allclose(out_item, ref_item, **tol))
    assert bool(jnp.allclose(out_user, ref_user, **tol))
    assert bool(jnp.allclose(out_proj, ref_proj, **tol))
    assert bool(jnp.allclose(fused_item, out_item, **tol))
    assert bool(jnp.allclose(fused_user, out_user, **tol))

    print("KERNEL_OK")
</pallas_src>

<mosaic_0001>
module attributes {stable_mosaic.version = 11 : i64} {
  func.func @_rnn_update_kernel(%arg0: i32, %arg1: memref<8x32xf32, #tpu.memory_space<vmem>>, %arg2: memref<8x32xf32, #tpu.memory_space<vmem>>, %arg3: memref<8x1xf32, #tpu.memory_space<vmem>>, %arg4: memref<8x4xf32, #tpu.memory_space<vmem>>, %arg5: memref<32x32xf32, #tpu.memory_space<vmem>>, %arg6: memref<32x32xf32, #tpu.memory_space<vmem>>, %arg7: memref<4x32xf32, #tpu.memory_space<vmem>>, %arg8: memref<1x32xf32, #tpu.memory_space<vmem>>, %arg9: memref<1x32xf32, #tpu.memory_space<vmem>>, %arg10: memref<8x32xf32, #tpu.memory_space<vmem>>) attributes {dimension_semantics = [#tpu.dimension_semantics<parallel>], iteration_bounds = array<i64: 1>, scalar_prefetch = 0 : i64, scratch_operands = 0 : i64, tpu.core_type = #tpu.core_type<tc>, window_params = [{transform_indices = @transform_0, window_bounds = array<i64: 8, 32>}, {transform_indices = @transform_1, window_bounds = array<i64: 8, 32>}, {transform_indices = @transform_2, window_bounds = array<i64: 8, 1>}, {transform_indices = @transform_3, window_bounds = array<i64: 8, 4>}, {pipeline_mode = #tpu.pipeline_mode<synchronous>, transform_indices = @transform_4, window_bounds = array<i64: 32, 32>}, {pipeline_mode = #tpu.pipeline_mode<synchronous>, transform_indices = @transform_5, window_bounds = array<i64: 32, 32>}, {pipeline_mode = #tpu.pipeline_mode<synchronous>, transform_indices = @transform_6, window_bounds = array<i64: 4, 32>}, {pipeline_mode = #tpu.pipeline_mode<synchronous>, transform_indices = @transform_7, window_bounds = array<i64: 1, 32>}, {pipeline_mode = #tpu.pipeline_mode<synchronous>, transform_indices = @transform_8, window_bounds = array<i64: 1, 32>}, {transform_indices = @transform_9, window_bounds = array<i64: 8, 32>}]} {
    %c0 = arith.constant 0 : index
    %c0_0 = arith.constant 0 : index
    %0 = vector.load %arg1[%c0, %c0_0] : memref<8x32xf32, #tpu.memory_space<vmem>>, vector<8x32xf32>
    %c0_1 = arith.constant 0 : index
    %c0_2 = arith.constant 0 : index
    %1 = vector.load %arg2[%c0_1, %c0_2] : memref<8x32xf32, #tpu.memory_space<vmem>>, vector<8x32xf32>
    %c0_3 = arith.constant 0 : index
    %c0_4 = arith.constant 0 : index
    %2 = vector.load %arg3[%c0_3, %c0_4] : memref<8x1xf32, #tpu.memory_space<vmem>>, vector<8x1xf32>
    %c0_5 = arith.constant 0 : index
    %c0_6 = arith.constant 0 : index
    %3 = vector.load %arg4[%c0_5, %c0_6] : memref<8x4xf32, #tpu.memory_space<vmem>>, vector<8x4xf32>
    %c0_7 = arith.constant 0 : index
    %c0_8 = arith.constant 0 : index
    %4 = vector.load %arg5[%c0_7, %c0_8] : memref<32x32xf32, #tpu.memory_space<vmem>>, vector<32x32xf32>
    %c0_9 = arith.constant 0 : index
    %c0_10 = arith.constant 0 : index
    %5 = vector.load %arg6[%c0_9, %c0_10] : memref<32x32xf32, #tpu.memory_space<vmem>>, vector<32x32xf32>
    %c0_11 = arith.constant 0 : index
    %c0_12 = arith.constant 0 : index
    %6 = vector.load %arg7[%c0_11, %c0_12] : memref<4x32xf32, #tpu.memory_space<vmem>>, vector<4x32xf32>
    %c0_13 = arith.constant 0 : index
    %c0_14 = arith.constant 0 : index
    %7 = vector.load %arg8[%c0_13, %c0_14] : memref<1x32xf32, #tpu.memory_space<vmem>>, vector<1x32xf32>
    %c0_15 = arith.constant 0 : index
    %c0_16 = arith.constant 0 : index
    %8 = vector.load %arg9[%c0_15, %c0_16] : memref<1x32xf32, #tpu.memory_space<vmem>>, vector<1x32xf32>
    %cst = arith.constant dense<0.000000e+00> : vector<8x32xf32>
    %9 = tpu.matmul %0, %4, %cst {dimension_numbers = #tpu.dot_dimension_numbers<[1], [0], [0], [1], [0, 0, 1, 1], [], []>} : vector<8x32xf32>, vector<32x32xf32>, vector<8x32xf32> -> vector<8x32xf32>
    %cst_17 = arith.constant dense<0.000000e+00> : vector<8x32xf32>
    %10 = tpu.matmul %1, %5, %cst_17 {dimension_numbers = #tpu.dot_dimension_numbers<[1], [0], [0], [1], [0, 0, 1, 1], [], []>} : vector<8x32xf32>, vector<32x32xf32>, vector<8x32xf32> -> vector<8x32xf32>
    %11 = arith.addf %9, %10 : vector<8x32xf32>
    %cst_18 = arith.constant dense<0.000000e+00> : vector<8x32xf32>
    %12 = tpu.matmul %3, %6, %cst_18 {dimension_numbers = #tpu.dot_dimension_numbers<[1], [0], [0], [1], [0, 0, 1, 1], [], []>} : vector<8x4xf32>, vector<4x32xf32>, vector<8x32xf32> -> vector<8x32xf32>
    %13 = arith.addf %11, %12 : vector<8x32xf32>
    %14 = vector.broadcast %2 : vector<8x1xf32> to vector<8x32xf32>
    %15 = vector.broadcast %7 : vector<1x32xf32> to vector<8x32xf32>
    %16 = arith.mulf %14, %15 : vector<8x32xf32>
    %17 = arith.addf %13, %16 : vector<8x32xf32>
    %18 = vector.broadcast %8 : vector<1x32xf32> to vector<8x32xf32>
    %19 = arith.addf %17, %18 : vector<8x32xf32>
    %20 = math.tanh %19 : vector<8x32xf32>
    %21 = arith.mulf %20, %20 : vector<8x32xf32>
    %cst_19 = arith.constant dense<0.000000e+00> : vector<8xf32>
    %22 = vector.multi_reduction <add>, %21, %cst_19 [1] : vector<8x32xf32> to vector<8xf32>
    %23 = vector.shape_cast %22 : vector<8xf32> to vector<8x1xf32>
    %cst_20 = arith.constant 1.000000e-24 : f32
    %24 = vector.broadcast %cst_20 : f32 to vector<8x1xf32>
    %25 = arith.maximumf %23, %24 : vector<8x1xf32>
    %26 = math.rsqrt %25 : vector<8x1xf32>
    %27 = vector.broadcast %26 : vector<8x1xf32> to vector<8x32xf32>
    %28 = arith.mulf %20, %27 : vector<8x32xf32>
    %c0_21 = arith.constant 0 : index
    %c0_22 = arith.constant 0 : index
    %29 = vector.load %arg10[%c0_21, %c0_22] : memref<8x32xf32, #tpu.memory_space<vmem>>, vector<8x32xf32>
    tpu.vector_store %arg10[%c0_21, %c0_22], %28 {strides = array<i32>} : memref<8x32xf32, #tpu.memory_space<vmem>>, vector<8x32xf32>,
    return
  }
  func.func @transform_0(%arg0: i32) -> (i32, i32) {
    %c0_i32 = arith.constant 0 : i32
    %c0_i32_0 = arith.constant 0 : i32
    return %arg0, %c0_i32 : i32, i32
  }
  func.func @transform_1(%arg0: i32) -> (i32, i32) {
    %c0_i32 = arith.constant 0 : i32
    %c0_i32_0 = arith.constant 0 : i32
    return %arg0, %c0_i32 : i32, i32
  }
  func.func @transform_2(%arg0: i32) -> (i32, i32) {
    %c0_i32 = arith.constant 0 : i32
    %c0_i32_0 = arith.constant 0 : i32
    return %arg0, %c0_i32 : i32, i32
  }
  func.func @transform_3(%arg0: i32) -> (i32, i32) {
    %c0_i32 = arith.constant 0 : i32
    %c0_i32_0 = arith.constant 0 : i32
    return %arg0, %c0_i32 : i32, i32
  }
  func.func @transform_4(%arg0: i32) -> (i32, i32) {
    %c0_i32 = arith.constant 0 : i32
    %c0_i32_0 = arith.constant 0 : i32
    %c0_i32_1 = arith.constant 0 : i32
    return %c0_i32, %c0_i32_0 : i32, i32
  }
  func.func @transform_5(%arg0: i32) -> (i32, i32) {
    %c0_i32 = arith.constant 0 : i32
    %c0_i32_0 = arith.constant 0 : i32
    %c0_i32_1 = arith.constant 0 : i32
    return %c0_i32, %c0_i32_0 : i32, i32
  }
  func.func @transform_6(%arg0: i32) -> (i32, i32) {
    %c0_i32 = arith.constant 0 : i32
    %c0_i32_0 = arith.constant 0 : i32
    %c0_i32_1 = arith.constant 0 : i32
    return %c0_i32, %c0_i32_0 : i32, i32
  }
  func.func @transform_7(%arg0: i32) -> (i32, i32) {
    %c0_i32 = arith.constant 0 : i32
    %c0_i32_0 = arith.constant 0 : i32
    %c0_i32_1 = arith.constant 0 : i32
    return %c0_i32, %c0_i32_0 : i32, i32
  }
  func.func @transform_8(%arg0: i32) -> (i32, i32) {
    %c0_i32 = arith.constant 0 : i32
    %c0_i32_0 = arith.constant 0 : i32
    %c0_i32_1 = arith.constant 0 : i32
    return %c0_i32, %c0_i32_0 : i32, i32
  }
  func.func @transform_9(%arg0: i32) -> (i32, i32) {
    %c0_i32 = arith.constant 0 : i32
    %c0_i32_0 = arith.constant 0 : i32
    return %arg0, %c0_i32 : i32, i32
  }
}

</mosaic_0001>

<llo_original>
// kernel: jodie_forward.1
$region0: #{jodie_forward.1}
  #allocation0 [shape = 'u32[]', space=smem, size = 0x4, offset = 0x4, fixed_abs, tag = 'smem constant byte address 0x4 - core index']
  #allocation1 [shape = 'u32[144,128]{1,0:T(1,128)}', space=vmem, size = 0x12000, scoped, tag = 'internal scratch']
  %s0 = inlined_call_operand.hbm [shape: f32[8,32], index: 0, kind: input, shape index: {}]
  %s1 = inlined_call_operand.vmem [shape: f32[8,32], index: 1, kind: input, shape index: {}]
  %s2 = inlined_call_operand.vmem [shape: f32[8,1], index: 2, kind: input, shape index: {}]
  %s3 = inlined_call_operand.vmem [shape: f32[8,4], index: 3, kind: input, shape index: {}]
  %s4 = inlined_call_operand.hbm [shape: f32[32,32], index: 4, kind: input, shape index: {}]
  %s5 = inlined_call_operand.vmem [shape: f32[32,32], index: 5, kind: input, shape index: {}]
  %s6 = inlined_call_operand.hbm [shape: f32[4,32], index: 6, kind: input, shape index: {}]
  %s7 = inlined_call_operand.vmem [shape: f32[1,32], index: 7, kind: input, shape index: {}]
  %s8 = inlined_call_operand.hbm [shape: f32[1,32], index: 8, kind: input, shape index: {}]
  %s9 = inlined_call_operand.hbm [shape: f32[8,32], index: 9, kind: output, shape index: {}]
  %s10 = sld [smem:[#allocation0]]
  $region62: #{jodie_forward.1} parent=0
    _
  %s12 = ssub.s32 1, %s10
  %s13 = scalar_select 0, %s12, %s10
  $region1: #{jodie_forward.1} parent=0
    #allocation2 [shape = 'u8[4096]{0}', space=vmem, size = 0x1000, scoped, tag = 'input window, operand 0, single buffered']
    #allocation3 [shape = 's32[1]{0}', space=sflag, size = 0x4, scoped, tag = 'scoped memory for jodie_forward.1']
    #allocation4 [shape = 's32[1]{0}', space=sflag, size = 0x4, scoped, tag = 'scoped memory for jodie_forward.1']
    #allocation5 [shape = 'u8[16384]{0}', space=vmem, size = 0x4000, scoped, tag = 'input window, operand 4, single buffered']
    #allocation6 [shape = 's32[1]{0}', space=sflag, size = 0x4, scoped, tag = 'scoped memory for jodie_forward.1']
    #allocation7 [shape = 'u8[2048]{0}', space=vmem, size = 0x800, scoped, tag = 'input window, operand 6, single buffered']
    #allocation8 [shape = 'u8[512]{0}', space=vmem, size = 0x400, scoped, tag = 'input window, operand 8, single buffered']
    #allocation9 [shape = 's32[1]{0}', space=sflag, size = 0x4, scoped, tag = 'scoped memory for jodie_forward.1']
    #allocation10 [shape = 'u8[4096]{0}', space=vmem, size = 0x1000, scoped, tag = 'output window, operand 0, single buffered']
    %14 = vsyncpa [#allocation3], 0
    %15 = vsyncpa [#allocation6], 0
    %16 = vsyncpa [#allocation9], 0
    %17 = vsyncpa [#allocation4], 0
    // Predicated region
    $region2: #{jodie_forward.1} parent=1 // pred_check
      _
    $region3: #{jodie_forward.1} parent=1 // pred_check_branch
      %19 = sbr.rel (0) target = $region5
    $region4: #{jodie_forward.1} parent=1 // pred_region
      %s21 = ssub.s32 128, 128
      %22 = vsyncadd [#allocation3], %s21
      %s24 = sshll.u32 [#allocation2], 4
      %s25 = int_to_ptr.vmem [resolvable:$true] %s24
      %27 = dma.hbm_to_vmem [thread:$0]  %s0, 128, %s25, [#allocation3]
    $region5: #{jodie_forward.1} parent=1 // pred_fallthru
      _
    // Predicated region
    $region6: #{jodie_forward.1} parent=1 // pred_check
      _
    $region7: #{jodie_forward.1} parent=1 // pred_check_branch
      %29 = sbr.rel (0) target = $region9
    $region8: #{jodie_forward.1} parent=1 // pred_region
      _
    $region9: #{jodie_forward.1} parent=1 // pred_fallthru
      _
    // Predicated region
    $region10: #{jodie_forward.1} parent=1 // pred_check
      _
    $region11: #{jodie_forward.1} parent=1 // pred_check_branch
      %31 = sbr.rel (0) target = $region13
    $region12: #{jodie_forward.1} parent=1 // pred_region
      _
    $region13: #{jodie_forward.1} parent=1 // pred_fallthru
      _
    // Predicated region
    $region14: #{jodie_forward.1} parent=1 // pred_check
      _
    $region15: #{jodie_forward.1} parent=1 // pred_check_branch
      %33 = sbr.rel (0) target = $region17
    $region16: #{jodie_forward.1} parent=1 // pred_region
      _
    $region17: #{jodie_forward.1} parent=1 // pred_fallthru
      _
    // Predicated region
    $region18: #{jodie_forward.1} parent=1 // pred_check
      _
    $region19: #{jodie_forward.1} parent=1 // pred_check_branch
      %35 = sbr.rel (0) target = $region21
    $region20: #{jodie_forward.1} parent=1 // pred_region
      %s37 = ssub.s32 512, 512
      %38 = vsyncadd [#allocation6], %s37
      %s39 = sshll.u32 [#allocation5], 4
      %s40 = int_to_ptr.vmem [resolvable:$true] %s39
      %45 = dma.hbm_to_vmem [thread:$0]  %s4, 512, %s40, [#allocation6], 128, 128, 8
    $region21: #{jodie_forward.1} parent=1 // pred_fallthru
      _
    // Predicated region
    $region22: #{jodie_forward.1} parent=1 // pred_check
      _
    $region23: #{jodie_forward.1} parent=1 // pred_check_branch
      %47 = sbr.rel (0) target = $region25
    $region24: #{jodie_forward.1} parent=1 // pred_region
      _
    $region25: #{jodie_forward.1} parent=1 // pred_fallthru
      _
    // Predicated region
    $region26: #{jodie_forward.1} parent=1 // pred_check
      _
    $region27: #{jodie_forward.1} parent=1 // pred_check_branch
      %49 = sbr.rel (0) target = $region29
    $region28: #{jodie_forward.1} parent=1 // pred_region
      %s51 = ssub.s32 64, 64
      %52 = vsyncadd [#allocation6], %s51
      %s54 = sshll.u32 [#allocation7], 4
      %s55 = int_to_ptr.vmem [resolvable:$true] %s54
      %57 = dma.hbm_to_vmem [thread:$0]  %s6, 64, %s55, [#allocation6]
    $region29: #{jodie_forward.1} parent=1 // pred_fallthru
      _
    // Predicated region
    $region30: #{jodie_forward.1} parent=1 // pred_check
      _
    $region31: #{jodie_forward.1} parent=1 // pred_check_branch
      %59 = sbr.rel (0) target = $region33
    $region32: #{jodie_forward.1} parent=1 // pred_region
      _
    $region33: #{jodie_forward.1} parent=1 // pred_fallthru
      _
    // Predicated region
    $region34: #{jodie_forward.1} parent=1 // pred_check
      _
    $region35: #{jodie_forward.1} parent=1 // pred_check_branch
      %61 = sbr.rel (0) target = $region37
    $region36: #{jodie_forward.1} parent=1 // pred_region
      %s63 = ssub.s32 16, 16
      %64 = vsyncadd [#allocation9], %s63
      %s66 = sshll.u32 [#allocation8], 4
      %s67 = int_to_ptr.vmem [resolvable:$true] %s66
      %69 = dma.hbm_to_vmem [thread:$0]  %s8, 16, %s67, [#allocation9]
    $region37: #{jodie_forward.1} parent=1 // pred_fallthru
      _
    // Predicated region
    $region38: #{jodie_forward.1} parent=1 // pred_check
      _
    $region39: #{jodie_forward.1} parent=1 // pred_check_branch
      %71 = sbr.rel (0) target = $region41
    $region40: #{jodie_forward.1} parent=1 // pred_region
      %72 = dma.done [#allocation3], 128
    $region41: #{jodie_forward.1} parent=1 // pred_fallthru
      _
    // Predicated region
    $region42: #{jodie_forward.1} parent=1 // pred_check
      _
    $region43: #{jodie_forward.1} parent=1 // pred_check_branch
      %74 = sbr.rel (0) target = $region45
    $region44: #{jodie_forward.1} parent=1 // pred_region
      %75 = dma.done [#allocation6], 512
    $region45: #{jodie_forward.1} parent=1 // pred_fallthru
      _
    // Predicated region
    $region46: #{jodie_forward.1} parent=1 // pred_check
      _
    $region47: #{jodie_forward.1} parent=1 // pred_check_branch
      %77 = sbr.rel (0) target = $region49
    $region48: #{jodie_forward.1} parent=1 // pred_region
      %78 = dma.done [#allocation6], 64
    $region49: #{jodie_forward.1} parent=1 // pred_fallthru
      _
    // Predicated region
    $region50: #{jodie_forward.1} parent=1 // pred_check
      _
    $region51: #{jodie_forward.1} parent=1 // pred_check_branch
      %80 = sbr.rel (0) target = $region53
    $region52: #{jodie_forward.1} parent=1 // pred_region
      %81 = dma.done [#allocation9], 16
    $region53: #{jodie_forward.1} parent=1 // pred_fallthru
      _
    %v82 = vld [vmem:[#allocation2] sm:$0xff]
    %v83 = vld [vmem:[%s1] sm:$0xff]
    %v84 = vld [vmem:[%s2] sm:$0xff]
    %v85 = vld [vmem:[%s3] sm:$0xff]
    %v86 = vld [vmem:[#allocation5] sm:$0xff]
    %v87 = vld [vmem:[#allocation5 + $0x8] sm:$0xff]
    %v88 = vld [vmem:[#allocation5 + $0x10] sm:$0xff]
    %v89 = vld [vmem:[#allocation5 + $0x18] sm:$0xff]
    %v90 = vld [vmem:[%s5] sm:$0xff]
    %v91 = vld [vmem:[%s5 + $0x8] sm:$0xff]
    %v92 = vld [vmem:[%s5 + $0x10] sm:$0xff]
    %v93 = vld [vmem:[%s5 + $0x18] sm:$0xff]
    %v94 = vld [vmem:[#allocation7] sm:$0xf]
    %v95 = vld [vmem:[%s7] sm:$0x1]
    %v96 = vld [vmem:[#allocation8] sm:$0x1]
    %vm97 = vcmask 261120
    %v99 = vsel %vm97, %v83, 0
    %101 = vmatprep.subr.mxu0 0.0
    %102 = vmatpush1.msra.mxu0 %v90
    %103 = vmatprep.subr.mxu0 0.0
    %104 = vmatpush1.msra.mxu0 %v91
    %105 = vmatprep.subr.mxu0 0.0
    %106 = vmatpush1.msra.mxu0 %v92
    %107 = vmatprep.subr.mxu0 0.0
    %108 = vmatpush1.msra.mxu0 %v93
    %109 = vmatprep.subr.mxu0 0.0
    %110 = vmatpush1.msra.mxu0 0.0
    %111 = vmatprep.subr.mxu0 0.0
    %112 = vmatpush1.msra.mxu0 0.0
    %113 = vmatprep.subr.mxu0 0.0
    %114 = vmatpush1.msra.mxu0 0.0
    %115 = vmatprep.subr.mxu0 0.0
    %116 = vmatpush1.msra.mxu0 0.0
    %117 = vmatprep.subr.mxu0 0.0
    %118 = vmatpush1.msra.mxu0 0.0
    %119 = vmatprep.subr.mxu0 0.0
    %120 = vmatpush1.msra.mxu0 0.0
    %121 = vmatprep.subr.mxu0 0.0
    %122 = vmatpush1.msra.mxu0 0.0
    %123 = vmatprep.subr.mxu0 0.0
    %124 = vmatpush1.msra.mxu0 0.0
    %125 = vmatprep.subr.mxu0 0.0
    %126 = vmatpush1.msra.mxu0 0.0
    %127 = vmatprep.subr.mxu0 0.0
    %128 = vmatpush1.msra.mxu0 0.0
    %129 = vmatprep.subr.mxu0 0.0
    %130 = vmatpush1.msra.mxu0 0.0
    %131 = vmatprep.subr.mxu0 0.0
    %132 = vmatpush1.msra.mxu0 0.0
    %133 = vmatprep.subr.mxu0 0.0
    %134 = vmatpush1.msra.mxu0 0.0
    %135 = vmatprep.subr.mxu0 0.0
    %136 = vmatpush1.msra.mxu0 0.0
    %137 = vmatprep.subr.mxu0 0.0
    %138 = vmatpush1.msra.mxu0 0.0
    %139 = vmatprep.subr.mxu0 0.0
    %140 = vmatpush1.msra.mxu0 0.0
    %141 = vmatprep.subr.mxu0 0.0
    %142 = vmatpush1.msra.mxu0 0.0
    %143 = vmatprep.subr.mxu0 0.0
    %144 = vmatpush1.msra.mxu0 0.0
    %145 = vmatprep.subr.mxu0 0.0
    %146 = vmatpush1.msra.mxu0 0.0
    %147 = vmatprep.subr.mxu0 0.0
    %148 = vmatpush1.msra.mxu0 0.0
    %149 = vmatprep.subr.mxu0 0.0
    %150 = vmatpush1.msra.mxu0 0.0
    %151 = vmatprep.subr.mxu0 0.0
    %152 = vmatpush1.msra.mxu0 0.0
    %153 = vmatprep.subr.mxu0 0.0
    %154 = vmatpush1.msra.mxu0 0.0
    %155 = vmatprep.subr.mxu0 0.0
    %156 = vmatpush1.msra.mxu0 0.0
    %157 = vmatprep.subr.mxu0 0.0
    %158 = vmatpush1.msra.mxu0 0.0
    %159 = vmatprep.subr.mxu0 0.0
    %160 = vmatpush1.msra.mxu0 0.0
    %161 = vmatprep.subr.mxu0 0.0
    %162 = vmatpush1.msra.mxu0 0.0
    %163 = vmatprep.subr.mxu0 0.0
    %164 = vmatpush1.msra.mxu0 0.0
    %165 = vmatprep.mubr.f32.mxu0 0.0
    %166 = vmatmul.mubr.f32.gmra.mrb[0].mxu0 %v99
    %v167 = vpop.f32.mrb[0].mxu0
    %v168 = vadd.f32 0.0, %v167
    %v169 = vpop.f32.mrb[0].mxu0
    %170 = vdwg.mxu0
    %v172 = vsel %vm97, %v82, 0
    %174 = vmatprep.subr.mxu0 0.0
    %175 = vmatpush1.msra.mxu0 %v86
    %176 = vmatprep.subr.mxu0 0.0
    %177 = vmatpush1.msra.mxu0 %v87
    %178 = vmatprep.subr.mxu0 0.0
    %179 = vmatpush1.msra.mxu0 %v88
    %180 = vmatprep.subr.mxu0 0.0
    %181 = vmatpush1.msra.mxu0 %v89
    %182 = vmatprep.subr.mxu0 0.0
    %183 = vmatpush1.msra.mxu0 0.0
    %184 = vmatprep.subr.mxu0 0.0
    %185 = vmatpush1.msra.mxu0 0.0
    %186 = vmatprep.subr.mxu0 0.0
    %187 = vmatpush1.msra.mxu0 0.0
    %188 = vmatprep.subr.mxu0 0.0
    %189 = vmatpush1.msra.mxu0 0.0
    %190 = vmatprep.subr.mxu0 0.0
    %191 = vmatpush1.msra.mxu0 0.0
    %192 = vmatprep.subr.mxu0 0.0
    %193 = vmatpush1.msra.mxu0 0.0
    %194 = vmatprep.subr.mxu0 0.0
    %195 = vmatpush1.msra.mxu0 0.0
    %196 = vmatprep.subr.mxu0 0.0
    %197 = vmatpush1.msra.mxu0 0.0
    %198 = vmatprep.subr.mxu0 0.0
    %199 = vmatpush1.msra.mxu0 0.0
    %200 = vmatprep.subr.mxu0 0.0
    %201 = vmatpush1.msra.mxu0 0.0
    %202 = vmatprep.subr.mxu0 0.0
    %203 = vmatpush1.msra.mxu0 0.0
    %204 = vmatprep.subr.mxu0 0.0
    %205 = vmatpush1.msra.mxu0 0.0
    %206 = vmatprep.subr.mxu0 0.0
    %207 = vmatpush1.msra.mxu0 0.0
    %208 = vmatprep.subr.mxu0 0.0
    %209 = vmatpush1.msra.mxu0 0.0
    %210 = vmatprep.subr.mxu0 0.0
    %211 = vmatpush1.msra.mxu0 0.0
    %212 = vmatprep.subr.mxu0 0.0
    %213 = vmatpush1.msra.mxu0 0.0
    %214 = vmatprep.subr.mxu0 0.0
    %215 = vmatpush1.msra.mxu0 0.0
    %216 = vmatprep.subr.mxu0 0.0
    %217 = vmatpush1.msra.mxu0 0.0
    %218 = vmatprep.subr.mxu0 0.0
    %219 = vmatpush1.msra.mxu0 0.0
    %220 = vmatprep.subr.mxu0 0.0
    %221 = vmatpush1.msra.mxu0 0.0
    %222 = vmatprep.subr.mxu0 0.0
    %223 = vmatpush1.msra.mxu0 0.0
    %224 = vmatprep.subr.mxu0 0.0
    %225 = vmatpush1.msra.mxu0 0.0
    %226 = vmatprep.subr.mxu0 0.0
    %227 = vmatpush1.msra.mxu0 0.0
    %228 = vmatprep.subr.mxu0 0.0
    %229 = vmatpush1.msra.mxu0 0.0
    %230 = vmatprep.subr.mxu0 0.0
    %231 = vmatpush1.msra.mxu0 0.0
    %232 = vmatprep.subr.mxu0 0.0
    %233 = vmatpush1.msra.mxu0 0.0
    %234 = vmatprep.subr.mxu0 0.0
    %235 = vmatpush1.msra.mxu0 0.0
    %236 = vmatprep.subr.mxu0 0.0
    %237 = vmatpush1.msra.mxu0 0.0
    %238 = vmatprep.mubr.f32.mxu0 0.0
    %239 = vmatmul.mubr.f32.gmra.mrb[0].mxu0 %v172
    %v240 = vpop.f32.mrb[0].mxu0
    %v241 = vadd.f32 %v168, %v240
    %v242 = vpop.f32.mrb[0].mxu0
    %243 = vdwg.mxu0
    %vm244 = vcmask 31744
    %v246 = vsel %vm244, %v85, 0
    %vm248 = vcmask 1043456
    %v250 = vsel %vm248, %v94, 0
    %252 = vmatprep.subr.mxu0 0.0
    %253 = vmatpush1.msra.mxu0 %v250
    %254 = vmatprep.subr.mxu0 0.0
    %255 = vmatpush1.msra.mxu0 0.0
    %256 = vmatprep.subr.mxu0 0.0
    %257 = vmatpush1.msra.mxu0 0.0
    %258 = vmatprep.subr.mxu0 0.0
    %259 = vmatpush1.msra.mxu0 0.0
    %260 = vmatprep.subr.mxu0 0.0
    %261 = vmatpush1.msra.mxu0 0.0
    %262 = vmatprep.subr.mxu0 0.0
    %263 = vmatpush1.msra.mxu0 0.0
    %264 = vmatprep.subr.mxu0 0.0
    %265 = vmatpush1.msra.mxu0 0.0
    %266 = vmatprep.subr.mxu0 0.0
    %267 = vmatpush1.msra.mxu0 0.0
    %268 = vmatprep.subr.mxu0 0.0
    %269 = vmatpush1.msra.mxu0 0.0
    %270 = vmatprep.subr.mxu0 0.0
    %271 = vmatpush1.msra.mxu0 0.0
    %272 = vmatprep.subr.mxu0 0.0
    %273 = vmatpush1.msra.mxu0 0.0
    %274 = vmatprep.subr.mxu0 0.0
    %275 = vmatpush1.msra.mxu0 0.0
    %276 = vmatprep.subr.mxu0 0.0
    %277 = vmatpush1.msra.mxu0 0.0
    %278 = vmatprep.subr.mxu0 0.0
    %279 = vmatpush1.msra.mxu0 0.0
    %280 = vmatprep.subr.mxu0 0.0
    %281 = vmatpush1.msra.mxu0 0.0
    %282 = vmatprep.subr.mxu0 0.0
    %283 = vmatpush1.msra.mxu0 0.0
    %284 = vmatprep.subr.mxu0 0.0
    %285 = vmatpush1.msra.mxu0 0.0
    %286 = vmatprep.subr.mxu0 0.0
    %287 = vmatpush1.msra.mxu0 0.0
    %288 = vmatprep.subr.mxu0 0.0
    %289 = vmatpush1.msra.mxu0 0.0
    %290 = vmatprep.subr.mxu0 0.0
    %291 = vmatpush1.msra.mxu0 0.0
    %292 = vmatprep.subr.mxu0 0.0
    %293 = vmatpush1.msra.mxu0 0.0
    %294 = vmatprep.subr.mxu0 0.0
    %295 = vmatpush1.msra.mxu0 0.0
    %296 = vmatprep.subr.mxu0 0.0
    %297 = vmatpush1.msra.mxu0 0.0
    %298 = vmatprep.subr.mxu0 0.0
    %299 = vmatpush1.msra.mxu0 0.0
    %300 = vmatprep.subr.mxu0 0.0
    %301 = vmatpush1.msra.mxu0 0.0
    %302 = vmatprep.subr.mxu0 0.0
    %303 = vmatpush1.msra.mxu0 0.0
    %304 = vmatprep.subr.mxu0 0.0
    %305 = vmatpush1.msra.mxu0 0.0
    %306 = vmatprep.subr.mxu0 0.0
    %307 = vmatpush1.msra.mxu0 0.0
    %308 = vmatprep.subr.mxu0 0.0
    %309 = vmatpush1.msra.mxu0 0.0
    %310 = vmatprep.subr.mxu0 0.0
    %311 = vmatpush1.msra.mxu0 0.0
    %312 = vmatprep.subr.mxu0 0.0
    %313 = vmatpush1.msra.mxu0 0.0
    %314 = vmatprep.subr.mxu0 0.0
    %315 = vmatpush1.msra.mxu0 0.0
    %316 = vmatprep.mubr.f32.mxu0 0.0
    %317 = vmatmul.mubr.f32.gmra.mrb[0].mxu0 %v246
    %v318 = vpop.f32.mrb[0].mxu0
    %v319 = vadd.f32 0.0, %v318
    %v320 = vpop.f32.mrb[0].mxu0
    %321 = vdwg.mxu0
    %v322 = vadd.f32 %v241, %v319
    %324 = vset.pattern.permute.xlu0 0
    %325 = vperm.xlu0 %324, %v84
    %v326 = vpop.permute.xlu0 %325
    %v329 = vlaneseq
    %v330 = vshrl.u32 %v329, 7
    %v331 = vsub.s32 0, %v330
    %v332 = vrot.slane %v95, %v331
    %v334 = vmul.f32 %v326, %v332
    %v335 = vadd.f32 %v322, %v334
    %v337 = vlaneseq
    %v338 = vshrl.u32 %v337, 7
    %v339 = vsub.s32 0, %v338
    %v340 = vrot.slane %v96, %v339
    %v342 = vadd.f32 %v335, %v340
    %v343 = vtanh.pop %v342
    %v344 = vmul.f32 %v343, %v343
    %v345 = vsel %vm97, %v344, 0.0
    %346 = vadd.xlane.f32.xlu0 %v345
    %v347 = vpop.xlane.xlu0 %346
    %v348 = vmax.f32 %v347, 1e-24
    %v349 = vrsqrt.pop %v348
    %v350 = vmul.f32 %v343, %v349
    %351 = vst.msk [vmem:[#allocation10] sm:$0xff] %vm97, %v350
    // Predicated region
    $region54: #{jodie_forward.1} parent=1 // pred_check
      _
    $region55: #{jodie_forward.1} parent=1 // pred_check_branch
      %353 = sbr.rel (0) target = $region57
    $region56: #{jodie_forward.1} parent=1 // pred_region
      %s355 = ssub.s32 128, 128
      %356 = vsyncadd [#allocation4], %s355
      %s358 = sshll.u32 [#allocation10], 4
      %s359 = int_to_ptr.vmem [resolvable:$true] %s358
      %361 = dma.vmem_to_hbm [thread:$0]  %s359, 128, %s9, [#allocation4]
    $region57: #{jodie_forward.1} parent=1 // pred_fallthru
      _
    // Predicated region
    $region58: #{jodie_forward.1} parent=1 // pred_check
      _
    $region59: #{jodie_forward.1} parent=1 // pred_check_branch
      %363 = sbr.rel (0) target = $region61
    $region60: #{jodie_forward.1} parent=1 // pred_region
      %364 = dma.done [#allocation4], 128
    $region61: #{jodie_forward.1} parent=1 // pred_fallthru
      _
    %365 = vsyncpa [#allocation3], 1
    %366 = vsyncpa [#allocation6], 1
    %367 = vsyncpa [#allocation9], 1
    %368 = vsyncpa [#allocation4], 1

</llo_original>
